<compile_context>
chip_gen: v5e
topology: v5e:2x2
jax: 0.10.0
libtpu: 0.0.40
codegen_flags: <defaults>
</compile_context>

<pallas_src>
import jax
import jax.numpy as jnp
from jax.experimental import pallas as pl
from jax.experimental.pallas import tpu as pltpu


def _embedding_kernel(ids_ref, table_ref, out_ref):
    # ids_ref:   (TN, 1)        int32   token ids for this tile
    # table_ref: (V_pad, D_pad) float32 full (padded) embedding table
    # out_ref:   (TN, D_pad)    float32
    ids = ids_ref[...]                                            # (TN, 1)
    tn = ids.shape[0]
    v = table_ref.shape[0]
    # One-hot selection matrix (VPU) -> row gather via MXU matmul.
    iota = jax.lax.broadcasted_iota(jnp.int32, (tn, v), 1)        # (TN, V_pad)
    onehot = (ids == iota).astype(table_ref.dtype)                # (TN, V_pad)
    out_ref[...] = jnp.dot(
        onehot, table_ref[...], preferred_element_type=jnp.float32
    ).astype(out_ref.dtype)


def phoneme_embedding(phoneme_ids, table, *, token_tile=256):
    """Equivalent of PhonemeEmbedding.forward(phoneme_ids)."""
    orig_shape = phoneme_ids.shape
    v, d = table.shape

    ids_flat = phoneme_ids.reshape(-1).astype(jnp.int32)
    n = ids_flat.shape[0]

    # --- pad vocab (MXU K dim / one-hot lane dim) to a multiple of 128 -------
    v_pad = pl.cdiv(v, 128) * 128
    table_p = table
    if v_pad != v:
        table_p = jnp.pad(table_p, ((0, v_pad - v), (0, 0)))

    # --- pad embedding dim (output lane dim) to a multiple of 128 ------------
    d_pad = pl.cdiv(d, 128) * 128
    if d_pad != d:
        table_p = jnp.pad(table_p, ((0, 0), (0, d_pad - d)))

    # --- choose token tile ----------------------------------------------------
    # Big tile to amortize per-grid-step overhead; clamp to the (sublane-rounded)
    # token count so tiny inputs run as a single grid step.
    n_rounded = max(8, pl.cdiv(n, 8) * 8)
    tile = min(token_tile, n_rounded)

    n_pad = pl.cdiv(n, tile) * tile
    if n_pad != n:
        ids_flat = jnp.pad(ids_flat, (0, n_pad - n))
    ids_2d = ids_flat.reshape(n_pad, 1)

    grid = (n_pad // tile,)

    out = pl.pallas_call(
        _embedding_kernel,
        out_shape=jax.ShapeDtypeStruct((n_pad, d_pad), table.dtype),
        grid_spec=pltpu.PrefetchScalarGridSpec(
            num_scalar_prefetch=0,
            grid=grid,
            in_specs=[
                pl.BlockSpec((tile, 1), lambda i: (i, 0)),        # ids tile
                pl.BlockSpec((v_pad, d_pad), lambda i: (0, 0)),   # full table
            ],
            out_specs=pl.BlockSpec((tile, d_pad), lambda i: (i, 0)),
        ),
        compiler_params=pltpu.CompilerParams(
            dimension_semantics=("parallel",),
        ),
    )(ids_2d, table_p)

    out = out[:n, :d]
    return out.reshape(*orig_shape, d)


if __name__ == "__main__":
    num_phonemes = 64
    embedding_dim = 128
    batch, seq = 2, 8

    key = jax.random.PRNGKey(0)
    k_table, k_ids = jax.random.split(key)

    # nn.Embedding default init: weight ~ N(0, 1), float32.
    table = jax.random.normal(
        k_table, (num_phonemes, embedding_dim), dtype=jnp.float32
    )
    phoneme_ids = jax.random.randint(
        k_ids, (batch, seq), 0, num_phonemes, dtype=jnp.int32
    )

    out = phoneme_embedding(phoneme_ids, table)
    out = jax.block_until_ready(out)

    # Reference check (plain JAX gather).
    ref = table[phoneme_ids]
    assert out.shape == (batch, seq, embedding_dim)
    assert jnp.allclose(out, ref, atol=1e-5), "mismatch vs reference gather"

    print("KERNEL_OK")
</pallas_src>

<mosaic_0001>
module attributes {stable_mosaic.version = 11 : i64} {
  func.func @_embedding_kernel(%arg0: i32, %arg1: memref<16x1xi32, #tpu.memory_space<vmem>>, %arg2: memref<128x128xf32, #tpu.memory_space<vmem>>, %arg3: memref<16x128xf32, #tpu.memory_space<vmem>>) attributes {dimension_semantics = [#tpu.dimension_semantics<parallel>], iteration_bounds = array<i64: 1>, scalar_prefetch = 0 : i64, scratch_operands = 0 : i64, tpu.core_type = #tpu.core_type<tc>, window_params = [{transform_indices = @transform_0, window_bounds = array<i64: 16, 1>}, {pipeline_mode = #tpu.pipeline_mode<synchronous>, transform_indices = @transform_1, window_bounds = array<i64: 128, 128>}, {transform_indices = @transform_2, window_bounds = array<i64: 16, 128>}]} {
    %c0 = arith.constant 0 : index
    %c0_0 = arith.constant 0 : index
    %0 = vector.load %arg1[%c0, %c0_0] : memref<16x1xi32, #tpu.memory_space<vmem>>, vector<16x1xi32>
    %1 = tpu.iota {dimensions = array<i32: 1>} : vector<16x128xi32>
    %2 = vector.broadcast %0 : vector<16x1xi32> to vector<16x128xi32>
    %3 = arith.cmpi eq, %2, %1 : vector<16x128xi32>
    %4 = arith.extui %3 : vector<16x128xi1> to vector<16x128xi32>
    %5 = arith.sitofp %4 : vector<16x128xi32> to vector<16x128xf32>
    %c0_1 = arith.constant 0 : index
    %c0_2 = arith.constant 0 : index
    %6 = vector.load %arg2[%c0_1, %c0_2] : memref<128x128xf32, #tpu.memory_space<vmem>>, vector<128x128xf32>
    %cst = arith.constant dense<0.000000e+00> : vector<16x128xf32>
    %7 = tpu.matmul %5, %6, %cst {dimension_numbers = #tpu.dot_dimension_numbers<[1], [0], [0], [1], [0, 0, 1, 1], [], []>} : vector<16x128xf32>, vector<128x128xf32>, vector<16x128xf32> -> vector<16x128xf32>
    %c0_3 = arith.constant 0 : index
    %c0_4 = arith.constant 0 : index
    %8 = vector.load %arg3[%c0_3, %c0_4] : memref<16x128xf32, #tpu.memory_space<vmem>>, vector<16x128xf32>
    tpu.vector_store %arg3[%c0_3, %c0_4], %7 {strides = array<i32>} : memref<16x128xf32, #tpu.memory_space<vmem>>, vector<16x128xf32>,
    return
  }
  func.func @transform_0(%arg0: i32) -> (i32, i32) {
    %c0_i32 = arith.constant 0 : i32
    %c0_i32_0 = arith.constant 0 : i32
    return %arg0, %c0_i32 : i32, i32
  }
  func.func @transform_1(%arg0: i32) -> (i32, i32) {
    %c0_i32 = arith.constant 0 : i32
    %c0_i32_0 = arith.constant 0 : i32
    %c0_i32_1 = arith.constant 0 : i32
    return %c0_i32, %c0_i32_0 : i32, i32
  }
  func.func @transform_2(%arg0: i32) -> (i32, i32) {
    %c0_i32 = arith.constant 0 : i32
    %c0_i32_0 = arith.constant 0 : i32
    return %arg0, %c0_i32 : i32, i32
  }
}

</mosaic_0001>

<llo_original>
// kernel: tpu_custom_call.1
$region0: #{tpu_custom_call.1}
  #allocation0 [shape = 'u32[]', space=smem, size = 0x4, offset = 0x4, fixed_abs, tag = 'smem constant byte address 0x4 - core index']
  #allocation1 [shape = 'u32[72,128]{1,0:T(1,128)}', space=vmem, size = 0x9000, scoped, tag = 'internal scratch']
  %s0 = inlined_call_operand.vmem [shape: s32[16,1], index: 0, kind: input, shape index: {}]
  %s1 = inlined_call_operand.hbm [shape: f32[128,128], index: 1, kind: input, shape index: {}]
  %s2 = inlined_call_operand.hbm [shape: f32[16,128], index: 2, kind: output, shape index: {}]
  %s3 = sld [smem:[#allocation0]]
  $region22: #{tpu_custom_call.1} parent=0
    _
  %s5 = ssub.s32 1, %s3
  %s6 = scalar_select 0, %s5, %s3
  $region1: #{tpu_custom_call.1} parent=0
    #allocation2 [shape = 'u8[65536]{0}', space=vmem, size = 0x10000, scoped, tag = 'input window, operand 1, single buffered']
    #allocation3 [shape = 's32[1]{0}', space=sflag, size = 0x4, scoped, tag = 'scoped memory for tpu_custom_call.1']
    #allocation4 [shape = 's32[1]{0}', space=sflag, size = 0x4, scoped, tag = 'scoped memory for tpu_custom_call.1']
    #allocation5 [shape = 'u8[8192]{0}', space=vmem, size = 0x2000, scoped, tag = 'output window, operand 0, single buffered']
    %7 = vsyncpa [#allocation3], 0
    %8 = vsyncpa [#allocation4], 0
    // Predicated region
    $region2: #{tpu_custom_call.1} parent=1 // pred_check
      _
    $region3: #{tpu_custom_call.1} parent=1 // pred_check_branch
      %10 = sbr.rel (0) target = $region5
    $region4: #{tpu_custom_call.1} parent=1 // pred_region
      _
    $region5: #{tpu_custom_call.1} parent=1 // pred_fallthru
      _
    // Predicated region
    $region6: #{tpu_custom_call.1} parent=1 // pred_check
      _
    $region7: #{tpu_custom_call.1} parent=1 // pred_check_branch
      %12 = sbr.rel (0) target = $region9
    $region8: #{tpu_custom_call.1} parent=1 // pred_region
      %14 = vsyncadd [#allocation3], 0
      %s15 = sshll.u32 %s1, 4
      %s16 = int_to_ptr.hbm [resolvable:$true] %s15
      %s17 = sshll.u32 [#allocation2], 4
      %s18 = int_to_ptr.vmem [resolvable:$true] %s17
      %23 = dma.hbm_to_vmem [thread:$0]  %s16, 2048, %s18, [#allocation3], 128, 128, 8
    $region9: #{tpu_custom_call.1} parent=1 // pred_fallthru
      _
    // Predicated region
    $region10: #{tpu_custom_call.1} parent=1 // pred_check
      _
    $region11: #{tpu_custom_call.1} parent=1 // pred_check_branch
      %25 = sbr.rel (0) target = $region13
    $region12: #{tpu_custom_call.1} parent=1 // pred_region
      %27 = dma.done [#allocation3], 2048
    $region13: #{tpu_custom_call.1} parent=1 // pred_fallthru
      _
    %v28 = vld [vmem:[%s0] sm:$0xff]
    %v29 = vld [vmem:[%s0 + $0x8] sm:$0xff]
    %v30 = vlaneseq
    %v31 = vand.u32 %v30, 127
    %32 = vset.pattern.permute.xlu0 0
    %33 = vperm.xlu0 %32, %v28
    %v34 = vpop.permute.xlu0 %33
    %35 = vset.pattern.permute.xlu0 0
    %36 = vperm.xlu0 %35, %v29
    %v37 = vpop.permute.xlu0 %36
    %vm38 = vcmp.eq.s32.totalorder %v34, %v31
    %vm39 = vcmp.eq.s32.totalorder %v37, %v31
    %v40 = vsel %vm38, 1, 0
    %v41 = vsel %vm39, 1, 0
    %v42 = vcvt.s32.f32 %v40
    %v43 = vcvt.s32.f32 %v41
    %v44 = vld [vmem:[#allocation2] sm:$0xff]
    %v45 = vld [vmem:[#allocation2 + $0x8] sm:$0xff]
    %v46 = vld [vmem:[#allocation2 + $0x10] sm:$0xff]
    %v47 = vld [vmem:[#allocation2 + $0x18] sm:$0xff]
    %v48 = vld [vmem:[#allocation2 + $0x20] sm:$0xff]
    %v49 = vld [vmem:[#allocation2 + $0x28] sm:$0xff]
    %v50 = vld [vmem:[#allocation2 + $0x30] sm:$0xff]
    %v51 = vld [vmem:[#allocation2 + $0x38] sm:$0xff]
    %v52 = vld [vmem:[#allocation2 + $0x40] sm:$0xff]
    %v53 = vld [vmem:[#allocation2 + $0x48] sm:$0xff]
    %v54 = vld [vmem:[#allocation2 + $0x50] sm:$0xff]
    %v55 = vld [vmem:[#allocation2 + $0x58] sm:$0xff]
    %v56 = vld [vmem:[#allocation2 + $0x60] sm:$0xff]
    %v57 = vld [vmem:[#allocation2 + $0x68] sm:$0xff]
    %v58 = vld [vmem:[#allocation2 + $0x70] sm:$0xff]
    %v59 = vld [vmem:[#allocation2 + $0x78] sm:$0xff]
    %60 = vmatpush.msra.mxu0 %v59
    %61 = vmatpush.msra.mxu0 %v58
    %62 = vmatpush.msra.mxu0 %v57
    %63 = vmatpush.msra.mxu0 %v56
    %64 = vmatpush.msra.mxu0 %v55
    %65 = vmatpush.msra.mxu0 %v54
    %66 = vmatpush.msra.mxu0 %v53
    %67 = vmatpush.msra.mxu0 %v52
    %68 = vmatpush.msra.mxu0 %v51
    %69 = vmatpush.msra.mxu0 %v50
    %70 = vmatpush.msra.mxu0 %v49
    %71 = vmatpush.msra.mxu0 %v48
    %72 = vmatpush.msra.mxu0 %v47
    %73 = vmatpush.msra.mxu0 %v46
    %74 = vmatpush.msra.mxu0 %v45
    %75 = vmatpush.msra.mxu0 %v44
    %76 = vmatmul.f32.gmra.mxu0 %v42
    %v77 = vpop.f32.mrf.mxu0
    %v78 = vadd.f32 0.0, %v77
    %79 = vmatmul.f32.gmra.mxu0 %v43
    %v80 = vpop.f32.mrf.mxu0
    %v81 = vadd.f32 0.0, %v80
    %82 = vdwg.mxu0
    %83 = vst [vmem:[#allocation5] sm:$0xff] %v78
    %84 = vst [vmem:[#allocation5 + $0x8] sm:$0xff] %v81
    // Predicated region
    $region14: #{tpu_custom_call.1} parent=1 // pred_check
      _
    $region15: #{tpu_custom_call.1} parent=1 // pred_check_branch
      %86 = sbr.rel (0) target = $region17
    $region16: #{tpu_custom_call.1} parent=1 // pred_region
      %88 = vsyncadd [#allocation4], 0
      %s89 = sshll.u32 [#allocation5], 4
      %s90 = int_to_ptr.vmem [resolvable:$true] %s89
      %s91 = sshll.u32 %s2, 4
      %s92 = int_to_ptr.hbm [resolvable:$true] %s91
      %97 = dma.vmem_to_hbm [thread:$0]  %s90, 256, %s92, [#allocation4], 128, 128, 8
    $region17: #{tpu_custom_call.1} parent=1 // pred_fallthru
      _
    // Predicated region
    $region18: #{tpu_custom_call.1} parent=1 // pred_check
      _
    $region19: #{tpu_custom_call.1} parent=1 // pred_check_branch
      %99 = sbr.rel (0) target = $region21
    $region20: #{tpu_custom_call.1} parent=1 // pred_region
      %101 = dma.done [#allocation4], 256
    $region21: #{tpu_custom_call.1} parent=1 // pred_fallthru
      _
    %102 = vsyncpa [#allocation3], 1
    %103 = vsyncpa [#allocation4], 1

</llo_original>
